<compile_context>
chip_gen: v5e
topology: v5e:2x2
jax: 0.10.0
libtpu: 0.0.40
codegen_flags: <defaults>
</compile_context>

<pallas_src>
import functools

import jax
import jax.numpy as jnp
from jax.experimental import pallas as pl
from jax.experimental.pallas import tpu as pltpu

_LANE = 128


def _round_up(x, m):
    return ((x + m - 1) // m) * m


# ---------------------------------------------------------------------------
# Fused kernel: forward_global_model + forward_pose_predictions.
#   fm_ref   : (B, D, T*H1*W1)   -> mean over last axis, (B, D) @ (D, Cpad)
#   pose_ref : (B, Dp, T, H2*W2) -> mean over last axis, swapaxes(1,2) of the tiny
#              pooled tile, (B*T, Dp) @ (Dp, Ppad), tanh
# ---------------------------------------------------------------------------
def _fused_kernel(fm_ref, pose_ref, wg_ref, bg_ref, wp_ref, bp_ref,
                  logits_ref, pose_out_ref):
    # ---- global-model branch: AvgPool3d((T, W, H)) + Linear ----
    pooled_g = jnp.mean(fm_ref[...], axis=-1)                         # (B, D)
    logits = jnp.dot(pooled_g, wg_ref[...],
                     preferred_element_type=jnp.float32) + bg_ref[...]
    logits_ref[...] = logits.astype(logits_ref.dtype)

    # ---- pose branch: AvgPool3d((1,14,14)) + view + transpose(1,2) + Linear + tanh ----
    B, Dp, T, _ = pose_ref.shape
    pooled_p = jnp.mean(pose_ref[...], axis=-1)                       # (B, Dp, T)
    # transpose(1,2) of the reference, done on the tiny pooled tile (XLU, no HBM traffic)
    lhs = jnp.swapaxes(pooled_p, 1, 2).reshape(B * T, Dp)             # (B*T, Dp)
    pose_logits = jnp.dot(lhs, wp_ref[...],
                          preferred_element_type=jnp.float32) + bp_ref[...]
    pose_out_ref[...] = jnp.tanh(pose_logits).astype(pose_out_ref.dtype)


@functools.partial(jax.jit, static_argnames=("nb_classes", "pose_dim"))
def glimpse_clouds_forward(final_fm, pose_fm, wg_pad, bg_pad, wp_pad, bp_pad,
                           *, nb_classes, pose_dim):
    B, D, T, H1, W1 = final_fm.shape
    _, Dp, Tp, H2, W2 = pose_fm.shape
    cpad = wg_pad.shape[1]
    ppad = wp_pad.shape[1]

    # Contiguous reshapes only (NO transpose in the wrapper): the pooled axes land on
    # the trailing lane dimension for both branches.
    fm_flat = final_fm.reshape(B, D, T * H1 * W1)
    pose_flat = pose_fm.reshape(B, Dp, Tp, H2 * W2)

    vmem = pl.BlockSpec(memory_space=pltpu.MemorySpace.VMEM)
    logits_pad, pose_pad = pl.pallas_call(
        _fused_kernel,
        out_shape=(jax.ShapeDtypeStruct((B, cpad), jnp.float32),
                   jax.ShapeDtypeStruct((B * Tp, ppad), jnp.float32)),
        in_specs=[vmem] * 6,
        out_specs=(vmem, vmem),
    )(fm_flat, pose_flat, wg_pad, bg_pad, wp_pad, bp_pad)

    # Padded weight/bias columns are zero, so slicing recovers the exact logical outputs.
    logits = logits_pad[:, :nb_classes]
    pose = pose_pad[:, :pose_dim].reshape(B, Tp, pose_dim)
    return logits, pose


# ---------------------------------------------------------------------------
# Module wrapper with deterministic parameter init (shapes from __init__).
# ---------------------------------------------------------------------------
class GlimpseCloudsPallas:
    """Pallas port of GlimpseClouds with options={'glimpse_clouds': False,
    'pose_predictions': True} (global-model path + pose predictions)."""

    def __init__(self, nb_classes=8, D=32, key=jax.random.PRNGKey(0)):
        self.nb_classes = nb_classes
        self.D = D
        Dp = D // 2
        P = 25 * 2 * 2  # fc_pose out_features, exactly as in the reference module
        self.P = P
        k1, k2, k3, k4 = jax.random.split(key, 4)
        s_g = 1.0 / jnp.sqrt(D)
        s_p = 1.0 / jnp.sqrt(Dp)
        # PyTorch nn.Linear stores (out, in); we keep (in, out) so the kernel does x @ W.
        self.w_global = jax.random.uniform(k1, (D, nb_classes), jnp.float32, -s_g, s_g)
        self.b_global = jax.random.uniform(k2, (1, nb_classes), jnp.float32, -s_g, s_g)
        self.w_pose = jax.random.uniform(k3, (Dp, P), jnp.float32, -s_p, s_p)
        self.b_pose = jax.random.uniform(k4, (1, P), jnp.float32, -s_p, s_p)

        # Lane-dense (128-padded) copies used by the kernel; padded columns are ZERO so
        # the post-call slice recovers exactly the logical outputs.
        cpad = _round_up(nb_classes, _LANE)
        ppad = _round_up(P, _LANE)
        self.w_global_pad = jnp.zeros((D, cpad), jnp.float32).at[:, :nb_classes].set(self.w_global)
        self.b_global_pad = jnp.zeros((1, cpad), jnp.float32).at[:, :nb_classes].set(self.b_global)
        self.w_pose_pad = jnp.zeros((Dp, ppad), jnp.float32).at[:, :P].set(self.w_pose)
        self.b_pose_pad = jnp.zeros((1, ppad), jnp.float32).at[:, :P].set(self.b_pose)

    def __call__(self, final_fm, pose_fm):
        # TODO(synk): inflated_resnet.get_feature_maps is an external backbone with no
        # source here; final_fm / pose_fm are taken directly as inputs instead.
        logits, pose = glimpse_clouds_forward(
            final_fm, pose_fm,
            self.w_global_pad, self.b_global_pad,
            self.w_pose_pad, self.b_pose_pad,
            nb_classes=self.nb_classes, pose_dim=self.P)
        attention_points = None
        # TODO(synk): forward_glimpse_clouds (zoom_ST spatial transformer, GRU zoomer /
        # workers, Mahalanobis distance requiring 'inv_covariance_cpu.npy') not implemented;
        # this mirrors the options['glimpse_clouds']=False (global-model) path.
        return logits, pose, attention_points


if __name__ == "__main__":
    key = jax.random.PRNGKey(0)
    kf, kp = jax.random.split(key)
    B, D, T = 2, 32, 4
    Dp = D // 2
    # final_fm: last-stage feature map (7x7 spatial); pose_fm: mid-stage map (14x14 spatial).
    final_fm = jax.random.normal(kf, (B, D, T, 7, 7), dtype=jnp.float32)
    pose_fm = jax.random.normal(kp, (B, Dp, T, 14, 14), dtype=jnp.float32)

    model = GlimpseCloudsPallas(nb_classes=8, D=D, key=jax.random.PRNGKey(0))
    logits, pose, attn = model(final_fm, pose_fm)
    jax.block_until_ready((logits, pose))

    # Pure-JAX reference check (uses unpadded weights).
    ref_logits = final_fm.mean(axis=(2, 3, 4)) @ model.w_global + model.b_global
    ref_pose = jnp.tanh(
        jnp.transpose(pose_fm.mean(axis=(3, 4)), (0, 2, 1)) @ model.w_pose + model.b_pose
    )
    assert logits.shape == (B, 8) and pose.shape == (B, T, 100) and attn is None
    assert jnp.allclose(logits, ref_logits, atol=1e-3, rtol=1e-3)
    assert jnp.allclose(pose, ref_pose, atol=1e-3, rtol=1e-3)
    print("KERNEL_OK")
</pallas_src>

<mosaic_0001>
module attributes {stable_mosaic.version = 11 : i64} {
  func.func @_fused_kernel(%arg0: memref<2x32x196xf32, #tpu.memory_space<vmem>>, %arg1: memref<2x16x4x196xf32, #tpu.memory_space<vmem>>, %arg2: memref<32x128xf32, #tpu.memory_space<vmem>>, %arg3: memref<1x128xf32, #tpu.memory_space<vmem>>, %arg4: memref<16x128xf32, #tpu.memory_space<vmem>>, %arg5: memref<1x128xf32, #tpu.memory_space<vmem>>, %arg6: memref<2x128xf32, #tpu.memory_space<vmem>>, %arg7: memref<8x128xf32, #tpu.memory_space<vmem>>) attributes {dimension_semantics = [], scalar_prefetch = 0 : i64, scratch_operands = 0 : i64, tpu.core_type = #tpu.core_type<tc>} {
    %c0 = arith.constant 0 : index
    %c0_0 = arith.constant 0 : index
    %c0_1 = arith.constant 0 : index
    %0 = vector.load %arg0[%c0, %c0_0, %c0_1] : memref<2x32x196xf32, #tpu.memory_space<vmem>>, vector<2x32x196xf32>
    %cst = arith.constant dense<0.000000e+00> : vector<2x32xf32>
    %1 = vector.multi_reduction <add>, %0, %cst [2] : vector<2x32x196xf32> to vector<2x32xf32>
    %cst_2 = arith.constant 1.960000e+02 : f32
    %2 = vector.broadcast %cst_2 : f32 to vector<2x32xf32>
    %3 = arith.divf %1, %2 : vector<2x32xf32>
    %c0_3 = arith.constant 0 : index
    %c0_4 = arith.constant 0 : index
    %4 = vector.load %arg2[%c0_3, %c0_4] : memref<32x128xf32, #tpu.memory_space<vmem>>, vector<32x128xf32>
    %cst_5 = arith.constant dense<0.000000e+00> : vector<2x128xf32>
    %5 = tpu.matmul %3, %4, %cst_5 {dimension_numbers = #tpu.dot_dimension_numbers<[1], [0], [0], [1], [0, 0, 1, 1], [], []>} : vector<2x32xf32>, vector<32x128xf32>, vector<2x128xf32> -> vector<2x128xf32>
    %c0_6 = arith.constant 0 : index
    %c0_7 = arith.constant 0 : index
    %6 = vector.load %arg3[%c0_6, %c0_7] : memref<1x128xf32, #tpu.memory_space<vmem>>, vector<1x128xf32>
    %7 = vector.broadcast %6 : vector<1x128xf32> to vector<2x128xf32>
    %8 = arith.addf %5, %7 : vector<2x128xf32>
    %c0_8 = arith.constant 0 : index
    %c0_9 = arith.constant 0 : index
    %9 = vector.load %arg6[%c0_8, %c0_9] : memref<2x128xf32, #tpu.memory_space<vmem>>, vector<2x128xf32>
    tpu.vector_store %arg6[%c0_8, %c0_9], %8 {strides = array<i32>} : memref<2x128xf32, #tpu.memory_space<vmem>>, vector<2x128xf32>,
    %c0_10 = arith.constant 0 : index
    %c0_11 = arith.constant 0 : index
    %c0_12 = arith.constant 0 : index
    %c0_13 = arith.constant 0 : index
    %10 = vector.load %arg1[%c0_10, %c0_11, %c0_12, %c0_13] : memref<2x16x4x196xf32, #tpu.memory_space<vmem>>, vector<2x16x4x196xf32>
    %cst_14 = arith.constant dense<0.000000e+00> : vector<2x16x4xf32>
    %11 = vector.multi_reduction <add>, %10, %cst_14 [3] : vector<2x16x4x196xf32> to vector<2x16x4xf32>
    %cst_15 = arith.constant 1.960000e+02 : f32
    %12 = vector.broadcast %cst_15 : f32 to vector<2x16x4xf32>
    %13 = arith.divf %11, %12 : vector<2x16x4xf32>
    %14 = tpu.transpose %13, [0, 2, 1] : vector<2x16x4xf32> -> vector<2x4x16xf32>
    %15 = vector.shape_cast %14 : vector<2x4x16xf32> to vector<8x16xf32>
    %c0_16 = arith.constant 0 : index
    %c0_17 = arith.constant 0 : index
    %16 = vector.load %arg4[%c0_16, %c0_17] : memref<16x128xf32, #tpu.memory_space<vmem>>, vector<16x128xf32>
    %cst_18 = arith.constant dense<0.000000e+00> : vector<8x128xf32>
    %17 = tpu.matmul %15, %16, %cst_18 {dimension_numbers = #tpu.dot_dimension_numbers<[1], [0], [0], [1], [0, 0, 1, 1], [], []>} : vector<8x16xf32>, vector<16x128xf32>, vector<8x128xf32> -> vector<8x128xf32>
    %c0_19 = arith.constant 0 : index
    %c0_20 = arith.constant 0 : index
    %18 = vector.load %arg5[%c0_19, %c0_20] : memref<1x128xf32, #tpu.memory_space<vmem>>, vector<1x128xf32>
    %19 = vector.broadcast %18 : vector<1x128xf32> to vector<8x128xf32>
    %20 = arith.addf %17, %19 : vector<8x128xf32>
    %21 = math.tanh %20 : vector<8x128xf32>
    %c0_21 = arith.constant 0 : index
    %c0_22 = arith.constant 0 : index
    %22 = vector.load %arg7[%c0_21, %c0_22] : memref<8x128xf32, #tpu.memory_space<vmem>>, vector<8x128xf32>
    tpu.vector_store %arg7[%c0_21, %c0_22], %21 {strides = array<i32>} : memref<8x128xf32, #tpu.memory_space<vmem>>, vector<8x128xf32>,
    return
  }
}

</mosaic_0001>

<llo_original>
// kernel: glimpse_clouds_forward.1
$region0: #{glimpse_clouds_forward.1}
  #allocation0 [shape = 'u32[]', space=smem, size = 0x4, offset = 0x4, fixed_abs, tag = 'smem constant byte address 0x4 - core index']
  #allocation1 [shape = 'u32[72,128]{1,0:T(1,128)}', space=vmem, size = 0x9000, scoped, tag = 'internal scratch']
  %s0 = inlined_call_operand.vmem [shape: f32[2,32,196], index: 0, kind: input, shape index: {}]
  %s1 = inlined_call_operand.vmem [shape: f32[2,16,4,196], index: 1, kind: input, shape index: {}]
  %s2 = inlined_call_operand.vmem [shape: f32[32,128], index: 2, kind: input, shape index: {}]
  %s3 = inlined_call_operand.vmem [shape: f32[1,128], index: 3, kind: input, shape index: {}]
  %s4 = inlined_call_operand.vmem [shape: f32[16,128], index: 4, kind: input, shape index: {}]
  %s5 = inlined_call_operand.vmem [shape: f32[1,128], index: 5, kind: input, shape index: {}]
  %s6 = inlined_call_operand.hbm [shape: f32[2,128], index: 6, kind: output, shape index: {0}]
  %s7 = inlined_call_operand.hbm [shape: f32[8,128], index: 7, kind: output, shape index: {1}]
  %8 = xla_tuple %s6, %s7
  %s9 = sld [smem:[#allocation0]]
  $region42: #{glimpse_clouds_forward.1} parent=0
    _
  %s11 = ssub.s32 1, %s9
  %s12 = scalar_select 0, %s11, %s9
  $region1: #{glimpse_clouds_forward.1} parent=0
    #allocation2 [shape = 'u8[1024]{0}', space=vmem, size = 0x400, scoped, tag = 'output window, operand 0, single buffered']
    #allocation3 [shape = 's32[1]{0}', space=sflag, size = 0x4, scoped, tag = 'scoped memory for glimpse_clouds_forward.1']
    #allocation4 [shape = 'u8[4096]{0}', space=vmem, size = 0x1000, scoped, tag = 'output window, operand 1, single buffered']
    #allocation5 [shape = 's32[1]{0}', space=sflag, size = 0x4, scoped, tag = 'scoped memory for glimpse_clouds_forward.1']
    %13 = vsyncpa [#allocation3], 0
    %14 = vsyncpa [#allocation5], 0
    // Predicated region
    $region2: #{glimpse_clouds_forward.1} parent=1 // pred_check
      _
    $region3: #{glimpse_clouds_forward.1} parent=1 // pred_check_branch
      %16 = sbr.rel (0) target = $region5
    $region4: #{glimpse_clouds_forward.1} parent=1 // pred_region
      _
    $region5: #{glimpse_clouds_forward.1} parent=1 // pred_fallthru
      _
    // Predicated region
    $region6: #{glimpse_clouds_forward.1} parent=1 // pred_check
      _
    $region7: #{glimpse_clouds_forward.1} parent=1 // pred_check_branch
      %18 = sbr.rel (0) target = $region9
    $region8: #{glimpse_clouds_forward.1} parent=1 // pred_region
      _
    $region9: #{glimpse_clouds_forward.1} parent=1 // pred_fallthru
      _
    // Predicated region
    $region10: #{glimpse_clouds_forward.1} parent=1 // pred_check
      _
    $region11: #{glimpse_clouds_forward.1} parent=1 // pred_check_branch
      %20 = sbr.rel (0) target = $region13
    $region12: #{glimpse_clouds_forward.1} parent=1 // pred_region
      _
    $region13: #{glimpse_clouds_forward.1} parent=1 // pred_fallthru
      _
    // Predicated region
    $region14: #{glimpse_clouds_forward.1} parent=1 // pred_check
      _
    $region15: #{glimpse_clouds_forward.1} parent=1 // pred_check_branch
      %22 = sbr.rel (0) target = $region17
    $region16: #{glimpse_clouds_forward.1} parent=1 // pred_region
      _
    $region17: #{glimpse_clouds_forward.1} parent=1 // pred_fallthru
      _
    // Predicated region
    $region18: #{glimpse_clouds_forward.1} parent=1 // pred_check
      _
    $region19: #{glimpse_clouds_forward.1} parent=1 // pred_check_branch
      %24 = sbr.rel (0) target = $region21
    $region20: #{glimpse_clouds_forward.1} parent=1 // pred_region
      _
    $region21: #{glimpse_clouds_forward.1} parent=1 // pred_fallthru
      _
    // Predicated region
    $region22: #{glimpse_clouds_forward.1} parent=1 // pred_check
      _
    $region23: #{glimpse_clouds_forward.1} parent=1 // pred_check_branch
      %26 = sbr.rel (0) target = $region25
    $region24: #{glimpse_clouds_forward.1} parent=1 // pred_region
      _
    $region25: #{glimpse_clouds_forward.1} parent=1 // pred_fallthru
      _
    %v27 = vld [vmem:[%s0] sm:$0xff]
    %v28 = vld [vmem:[%s0 + $0x8] sm:$0xff]
    %v29 = vld [vmem:[%s0 + $0x10] sm:$0xff]
    %v30 = vld [vmem:[%s0 + $0x18] sm:$0xff]
    %v31 = vld [vmem:[%s0 + $0x20] sm:$0xff]
    %v32 = vld [vmem:[%s0 + $0x28] sm:$0xff]
    %v33 = vld [vmem:[%s0 + $0x30] sm:$0xff]
    %v34 = vld [vmem:[%s0 + $0x38] sm:$0xff]
    %v35 = vld [vmem:[%s0 + $0x40] sm:$0xff]
    %v36 = vld [vmem:[%s0 + $0x48] sm:$0xff]
    %v37 = vld [vmem:[%s0 + $0x50] sm:$0xff]
    %v38 = vld [vmem:[%s0 + $0x58] sm:$0xff]
    %v39 = vld [vmem:[%s0 + $0x60] sm:$0xff]
    %v40 = vld [vmem:[%s0 + $0x68] sm:$0xff]
    %v41 = vld [vmem:[%s0 + $0x70] sm:$0xff]
    %v42 = vld [vmem:[%s0 + $0x78] sm:$0xff]
    %vm43 = vcmask 556032
    %v44 = vsel %vm43, %v28, 0.0
    %v45 = vadd.f32 %v27, %v44
    %46 = vadd.xlane.f32.xlu0 %v45
    %v47 = vpop.xlane.xlu0 %46
    %v48 = vsel %vm43, %v30, 0.0
    %v49 = vadd.f32 %v29, %v48
    %50 = vadd.xlane.f32.xlu0 %v49
    %v51 = vpop.xlane.xlu0 %50
    %v52 = vsel %vm43, %v32, 0.0
    %v53 = vadd.f32 %v31, %v52
    %54 = vadd.xlane.f32.xlu0 %v53
    %v55 = vpop.xlane.xlu0 %54
    %v56 = vsel %vm43, %v34, 0.0
    %v57 = vadd.f32 %v33, %v56
    %58 = vadd.xlane.f32.xlu0 %v57
    %v59 = vpop.xlane.xlu0 %58
    %v60 = vsel %vm43, %v36, 0.0
    %v61 = vadd.f32 %v35, %v60
    %62 = vadd.xlane.f32.xlu0 %v61
    %v63 = vpop.xlane.xlu0 %62
    %v64 = vsel %vm43, %v38, 0.0
    %v65 = vadd.f32 %v37, %v64
    %66 = vadd.xlane.f32.xlu0 %v65
    %v67 = vpop.xlane.xlu0 %66
    %v68 = vsel %vm43, %v40, 0.0
    %v69 = vadd.f32 %v39, %v68
    %70 = vadd.xlane.f32.xlu0 %v69
    %v71 = vpop.xlane.xlu0 %70
    %v72 = vsel %vm43, %v42, 0.0
    %v73 = vadd.f32 %v41, %v72
    %74 = vadd.xlane.f32.xlu0 %v73
    %v75 = vpop.xlane.xlu0 %74
    %v76 = vrcp.pop 196.0
    %v77 = vmul.f32 196.0, %v76
    %v78 = vsub.f32 1.0, %v77
    %v79 = vmul.f32 %v76, %v78
    %v80 = vadd.f32 %v76, %v79
    %vm81 = vweird.f32 %v76
    %v82 = vsel %vm81, %v76, %v80
    %v83 = vmul.f32 %v47, %v82
    %v84 = vmul.f32 %v51, %v82
    %v85 = vmul.f32 %v55, %v82
    %v86 = vmul.f32 %v59, %v82
    %v87 = vmul.f32 %v63, %v82
    %v88 = vmul.f32 %v67, %v82
    %v89 = vmul.f32 %v71, %v82
    %v90 = vmul.f32 %v75, %v82
    %v91 = vld [vmem:[%s2] sm:$0xff]
    %v92 = vld [vmem:[%s2 + $0x8] sm:$0xff]
    %v93 = vld [vmem:[%s2 + $0x10] sm:$0xff]
    %v94 = vld [vmem:[%s2 + $0x18] sm:$0xff]
    %v95 = vld [vmem:[%s3] sm:$0x1]
    %v97 = vperm.slane %v95, 0
    %v107 = vlaneseq
    %v108 = vand.u32 %v107, 127
    %v109 = vperm.slane %v83, %v108
    %v110 = vadd.s32 %v108, 4294967288
    %v111 = vperm.slane %v84, %v110
    %vm112 = vcmask 130112
    %v113 = vsel %vm112, %v111, %v109
    %v114 = vadd.s32 %v108, 4294967280
    %v115 = vperm.slane %v85, %v114
    %vm116 = vcmask 195712
    %v117 = vsel %vm116, %v115, %v113
    %v118 = vadd.s32 %v108, 4294967272
    %v119 = vperm.slane %v86, %v118
    %vm120 = vcmask 261312
    %v121 = vsel %vm120, %v119, %v117
    %v122 = vperm.slane %v87, %v108
    %v123 = vperm.slane %v88, %v110
    %v124 = vsel %vm112, %v123, %v122
    %v125 = vperm.slane %v89, %v114
    %v126 = vsel %vm116, %v125, %v124
    %v127 = vperm.slane %v90, %v118
    %v128 = vsel %vm120, %v127, %v126
    %vm129 = vcmask 1041409
    %v130 = vsel %vm129, %v128, %v121
    %vm131 = vcmask 261120
    %v132 = vsel %vm131, %v130, 0
    %134 = vmatpush.msra.mxu0 0.0
    %135 = vmatpush.msra.mxu0 0.0
    %136 = vmatpush.msra.mxu0 0.0
    %137 = vmatpush.msra.mxu0 0.0
    %138 = vmatpush.msra.mxu0 0.0
    %139 = vmatpush.msra.mxu0 0.0
    %140 = vmatpush.msra.mxu0 0.0
    %141 = vmatpush.msra.mxu0 0.0
    %142 = vmatpush.msra.mxu0 0.0
    %143 = vmatpush.msra.mxu0 0.0
    %144 = vmatpush.msra.mxu0 0.0
    %145 = vmatpush.msra.mxu0 0.0
    %146 = vmatpush.msra.mxu0 %v94
    %147 = vmatpush.msra.mxu0 %v93
    %148 = vmatpush.msra.mxu0 %v92
    %149 = vmatpush.msra.mxu0 %v91
    %150 = vmatmul.f32.gmra.mxu0 %v132
    %v151 = vpop.f32.mrf.mxu0
    %v152 = vadd.f32 %v97, %v151
    %153 = vdwg.mxu0
    %154 = vst [vmem:[#allocation2] sm:$0x3] %v152
    %v155 = vld [vmem:[%s1] sm:$0xff]
    %v156 = vld [vmem:[%s1 + $0x8] sm:$0xff]
    %v157 = vld [vmem:[%s1 + $0x10] sm:$0xff]
    %v158 = vld [vmem:[%s1 + $0x18] sm:$0xff]
    %v159 = vld [vmem:[%s1 + $0x20] sm:$0xff]
    %v160 = vld [vmem:[%s1 + $0x28] sm:$0xff]
    %v161 = vld [vmem:[%s1 + $0x30] sm:$0xff]
    %v162 = vld [vmem:[%s1 + $0x38] sm:$0xff]
    %v163 = vld [vmem:[%s1 + $0x40] sm:$0xff]
    %v164 = vld [vmem:[%s1 + $0x48] sm:$0xff]
    %v165 = vld [vmem:[%s1 + $0x50] sm:$0xff]
    %v166 = vld [vmem:[%s1 + $0x58] sm:$0xff]
    %v167 = vld [vmem:[%s1 + $0x60] sm:$0xff]
    %v168 = vld [vmem:[%s1 + $0x68] sm:$0xff]
    %v169 = vld [vmem:[%s1 + $0x70] sm:$0xff]
    %v170 = vld [vmem:[%s1 + $0x78] sm:$0xff]
    %v171 = vld [vmem:[%s1 + $0x80] sm:$0xff]
    %v172 = vld [vmem:[%s1 + $0x88] sm:$0xff]
    %v173 = vld [vmem:[%s1 + $0x90] sm:$0xff]
    %v174 = vld [vmem:[%s1 + $0x98] sm:$0xff]
    %v175 = vld [vmem:[%s1 + $0xa0] sm:$0xff]
    %v176 = vld [vmem:[%s1 + $0xa8] sm:$0xff]
    %v177 = vld [vmem:[%s1 + $0xb0] sm:$0xff]
    %v178 = vld [vmem:[%s1 + $0xb8] sm:$0xff]
    %v179 = vld [vmem:[%s1 + $0xc0] sm:$0xff]
    %v180 = vld [vmem:[%s1 + $0xc8] sm:$0xff]
    %v181 = vld [vmem:[%s1 + $0xd0] sm:$0xff]
    %v182 = vld [vmem:[%s1 + $0xd8] sm:$0xff]
    %v183 = vld [vmem:[%s1 + $0xe0] sm:$0xff]
    %v184 = vld [vmem:[%s1 + $0xe8] sm:$0xff]
    %v185 = vld [vmem:[%s1 + $0xf0] sm:$0xff]
    %v186 = vld [vmem:[%s1 + $0xf8] sm:$0xff]
    %219 = vst [vmem:[#allocation1] ss:$2 sm:$0xff] %v155
    %v220 = vld.sshfl [vmem:[#allocation1] sm:$0xff pattern:$0x75316420]
    %v221 = vld.sshfl [vmem:[#allocation1 + $0x8] sm:$0xff pattern:$0x75316420]
    %s222 = scalar_lea.vmem [#allocation1], 16
    %223 = vst [vmem:[%s222] ss:$2 sm:$0xff] %v156
    %v224 = vld.sshfl [vmem:[#allocation1 + $0x10] sm:$0xff pattern:$0x75316420]
    %v225 = vld.sshfl [vmem:[#allocation1 + $0x18] sm:$0xff pattern:$0x75316420]
    %s226 = scalar_lea.vmem [#allocation1], 32
    %227 = vst [vmem:[%s226] ss:$2 sm:$0xff] %v157
    %v228 = vld.sshfl [vmem:[#allocation1 + $0x20] sm:$0xff pattern:$0x75316420]
    %v229 = vld.sshfl [vmem:[#allocation1 + $0x28] sm:$0xff pattern:$0x75316420]
    %s230 = scalar_lea.vmem [#allocation1], 48
    %231 = vst [vmem:[%s230] ss:$2 sm:$0xff] %v158
    %v232 = vld.sshfl [vmem:[#allocation1 + $0x30] sm:$0xff pattern:$0x75316420]
    %v233 = vld.sshfl [vmem:[#allocation1 + $0x38] sm:$0xff pattern:$0x75316420]
    %234 = vst [vmem:[#allocation1] ss:$2 sm:$0xff] %v159
    %v235 = vld.sshfl [vmem:[#allocation1] sm:$0xff pattern:$0x75316420]
    %v236 = vld.sshfl [vmem:[#allocation1 + $0x8] sm:$0xff pattern:$0x75316420]
    %237 = vst [vmem:[%s222] ss:$2 sm:$0xff] %v160
    %v238 = vld.sshfl [vmem:[#allocation1 + $0x10] sm:$0xff pattern:$0x75316420]
    %v239 = vld.sshfl [vmem:[#allocation1 + $0x18] sm:$0xff pattern:$0x75316420]
    %240 = vst [vmem:[%s226] ss:$2 sm:$0xff] %v161
    %v241 = vld.sshfl [vmem:[#allocation1 + $0x20] sm:$0xff pattern:$0x75316420]
    %v242 = vld.sshfl [vmem:[#allocation1 + $0x28] sm:$0xff pattern:$0x75316420]
    %243 = vst [vmem:[%s230] ss:$2 sm:$0xff] %v162
    %v244 = vld.sshfl [vmem:[#allocation1 + $0x30] sm:$0xff pattern:$0x75316420]
    %v245 = vld.sshfl [vmem:[#allocation1 + $0x38] sm:$0xff pattern:$0x75316420]
    %246 = vst [vmem:[#allocation1] ss:$2 sm:$0xff] %v163
    %v247 = vld.sshfl [vmem:[#allocation1] sm:$0xff pattern:$0x75316420]
    %v248 = vld.sshfl [vmem:[#allocation1 + $0x8] sm:$0xff pattern:$0x75316420]
    %249 = vst [vmem:[%s222] ss:$2 sm:$0xff] %v164
    %v250 = vld.sshfl [vmem:[#allocation1 + $0x10] sm:$0xff pattern:$0x75316420]
    %v251 = vld.sshfl [vmem:[#allocation1 + $0x18] sm:$0xff pattern:$0x75316420]
    %252 = vst [vmem:[%s226] ss:$2 sm:$0xff] %v165
    %v253 = vld.sshfl [vmem:[#allocation1 + $0x20] sm:$0xff pattern:$0x75316420]
    %v254 = vld.sshfl [vmem:[#allocation1 + $0x28] sm:$0xff pattern:$0x75316420]
    %255 = vst [vmem:[%s230] ss:$2 sm:$0xff] %v166
    %v256 = vld.sshfl [vmem:[#allocation1 + $0x30] sm:$0xff pattern:$0x75316420]
    %v257 = vld.sshfl [vmem:[#allocation1 + $0x38] sm:$0xff pattern:$0x75316420]
    %258 = vst [vmem:[#allocation1] ss:$2 sm:$0xff] %v167
    %v259 = vld.sshfl [vmem:[#allocation1] sm:$0xff pattern:$0x75316420]
    %v260 = vld.sshfl [vmem:[#allocation1 + $0x8] sm:$0xff pattern:$0x75316420]
    %261 = vst [vmem:[%s222] ss:$2 sm:$0xff] %v168
    %v262 = vld.sshfl [vmem:[#allocation1 + $0x10] sm:$0xff pattern:$0x75316420]
    %v263 = vld.sshfl [vmem:[#allocation1 + $0x18] sm:$0xff pattern:$0x75316420]
    %264 = vst [vmem:[%s226] ss:$2 sm:$0xff] %v169
    %v265 = vld.sshfl [vmem:[#allocation1 + $0x20] sm:$0xff pattern:$0x75316420]
    %v266 = vld.sshfl [vmem:[#allocation1 + $0x28] sm:$0xff pattern:$0x75316420]
    %267 = vst [vmem:[%s230] ss:$2 sm:$0xff] %v170
    %v268 = vld.sshfl [vmem:[#allocation1 + $0x30] sm:$0xff pattern:$0x75316420]
    %v269 = vld.sshfl [vmem:[#allocation1 + $0x38] sm:$0xff pattern:$0x75316420]
    %270 = vst [vmem:[#allocation1] ss:$2 sm:$0xff] %v171
    %v271 = vld.sshfl [vmem:[#allocation1] sm:$0xff pattern:$0x75316420]
    %v272 = vld.sshfl [vmem:[#allocation1 + $0x8] sm:$0xff pattern:$0x75316420]
    %273 = vst [vmem:[%s222] ss:$2 sm:$0xff] %v172
    %v274 = vld.sshfl [vmem:[#allocation1 + $0x10] sm:$0xff pattern:$0x75316420]
    %v275 = vld.sshfl [vmem:[#allocation1 + $0x18] sm:$0xff pattern:$0x75316420]
    %276 = vst [vmem:[%s226] ss:$2 sm:$0xff] %v173
    %v277 = vld.sshfl [vmem:[#allocation1 + $0x20] sm:$0xff pattern:$0x75316420]
    %v278 = vld.sshfl [vmem:[#allocation1 + $0x28] sm:$0xff pattern:$0x75316420]
    %279 = vst [vmem:[%s230] ss:$2 sm:$0xff] %v174
    %v280 = vld.sshfl [vmem:[#allocation1 + $0x30] sm:$0xff pattern:$0x75316420]
    %v281 = vld.sshfl [vmem:[#allocation1 + $0x38] sm:$0xff pattern:$0x75316420]
    %282 = vst [vmem:[#allocation1] ss:$2 sm:$0xff] %v175
    %v283 = vld.sshfl [vmem:[#allocation1] sm:$0xff pattern:$0x75316420]
    %v284 = vld.sshfl [vmem:[#allocation1 + $0x8] sm:$0xff pattern:$0x75316420]
    %285 = vst [vmem:[%s222] ss:$2 sm:$0xff] %v176
    %v286 = vld.sshfl [vmem:[#allocation1 + $0x10] sm:$0xff pattern:$0x75316420]
    %v287 = vld.sshfl [vmem:[#allocation1 + $0x18] sm:$0xff pattern:$0x75316420]
    %288 = vst [vmem:[%s226] ss:$2 sm:$0xff] %v177
    %v289 = vld.sshfl [vmem:[#allocation1 + $0x20] sm:$0xff pattern:$0x75316420]
    %v290 = vld.sshfl [vmem:[#allocation1 + $0x28] sm:$0xff pattern:$0x75316420]
    %291 = vst [vmem:[%s230] ss:$2 sm:$0xff] %v178
    %v292 = vld.sshfl [vmem:[#allocation1 + $0x30] sm:$0xff pattern:$0x75316420]
    %v293 = vld.sshfl [vmem:[#allocation1 + $0x38] sm:$0xff pattern:$0x75316420]
    %294 = vst [vmem:[#allocation1] ss:$2 sm:$0xff] %v179
    %v295 = vld.sshfl [vmem:[#allocation1] sm:$0xff pattern:$0x75316420]
    %v296 = vld.sshfl [vmem:[#allocation1 + $0x8] sm:$0xff pattern:$0x75316420]
    %297 = vst [vmem:[%s222] ss:$2 sm:$0xff] %v180
    %v298 = vld.sshfl [vmem:[#allocation1 + $0x10] sm:$0xff pattern:$0x75316420]
    %v299 = vld.sshfl [vmem:[#allocation1 + $0x18] sm:$0xff pattern:$0x75316420]
    %300 = vst [vmem:[%s226] ss:$2 sm:$0xff] %v181
    %v301 = vld.sshfl [vmem:[#allocation1 + $0x20] sm:$0xff pattern:$0x75316420]
    %v302 = vld.sshfl [vmem:[#allocation1 + $0x28] sm:$0xff pattern:$0x75316420]
    %303 = vst [vmem:[%s230] ss:$2 sm:$0xff] %v182
    %v304 = vld.sshfl [vmem:[#allocation1 + $0x30] sm:$0xff pattern:$0x75316420]
    %v305 = vld.sshfl [vmem:[#allocation1 + $0x38] sm:$0xff pattern:$0x75316420]
    %306 = vst [vmem:[#allocation1] ss:$2 sm:$0xff] %v183
    %v307 = vld.sshfl [vmem:[#allocation1] sm:$0xff pattern:$0x75316420]
    %v308 = vld.sshfl [vmem:[#allocation1 + $0x8] sm:$0xff pattern:$0x75316420]
    %309 = vst [vmem:[%s222] ss:$2 sm:$0xff] %v184
    %v310 = vld.sshfl [vmem:[#allocation1 + $0x10] sm:$0xff pattern:$0x75316420]
    %v311 = vld.sshfl [vmem:[#allocation1 + $0x18] sm:$0xff pattern:$0x75316420]
    %312 = vst [vmem:[%s226] ss:$2 sm:$0xff] %v185
    %v313 = vld.sshfl [vmem:[#allocation1 + $0x20] sm:$0xff pattern:$0x75316420]
    %v314 = vld.sshfl [vmem:[#allocation1 + $0x28] sm:$0xff pattern:$0x75316420]
    %315 = vst [vmem:[%s230] ss:$2 sm:$0xff] %v186
    %v316 = vld.sshfl [vmem:[#allocation1 + $0x30] sm:$0xff pattern:$0x75316420]
    %v317 = vld.sshfl [vmem:[#allocation1 + $0x38] sm:$0xff pattern:$0x75316420]
    %vm382 = vcmask 1043456
    %v383 = vsel %vm382, %v220, 0.0
    %vm384 = vcmask 551936
    %v385 = vsel %vm384, %v221, 0.0
    %v386 = vadd.f32 %v383, %v385
    %387 = vadd.xlane.f32.xlu0 %v386
    %v388 = vpop.xlane.xlu0 %387
    %v389 = vsel %vm382, %v224, 0.0
    %v390 = vsel %vm384, %v225, 0.0
    %v391 = vadd.f32 %v389, %v390
    %392 = vadd.xlane.f32.xlu0 %v391
    %v393 = vpop.xlane.xlu0 %392
    %v394 = vsel %vm382, %v228, 0.0
    %v395 = vsel %vm384, %v229, 0.0
    %v396 = vadd.f32 %v394, %v395
    %397 = vadd.xlane.f32.xlu0 %v396
    %v398 = vpop.xlane.xlu0 %397
    %v399 = vsel %vm382, %v232, 0.0
    %v400 = vsel %vm384, %v233, 0.0
    %v401 = vadd.f32 %v399, %v400
    %402 = vadd.xlane.f32.xlu0 %v401
    %v403 = vpop.xlane.xlu0 %402
    %v404 = vsel %vm382, %v235, 0.0
    %v405 = vsel %vm384, %v236, 0.0
    %v406 = vadd.f32 %v404, %v405
    %407 = vadd.xlane.f32.xlu0 %v406
    %v408 = vpop.xlane.xlu0 %407
    %v409 = vsel %vm382, %v238, 0.0
    %v410 = vsel %vm384, %v239, 0.0
    %v411 = vadd.f32 %v409, %v410
    %412 = vadd.xlane.f32.xlu0 %v411
    %v413 = vpop.xlane.xlu0 %412
    %v414 = vsel %vm382, %v241, 0.0
    %v415 = vsel %vm384, %v242, 0.0
    %v416 = vadd.f32 %v414, %v415
    %417 = vadd.xlane.f32.xlu0 %v416
    %v418 = vpop.xlane.xlu0 %417
    %v419 = vsel %vm382, %v244, 0.0
    %v420 = vsel %vm384, %v245, 0.0
    %v421 = vadd.f32 %v419, %v420
    %422 = vadd.xlane.f32.xlu0 %v421
    %v423 = vpop.xlane.xlu0 %422
    %v424 = vsel %vm382, %v247, 0.0
    %v425 = vsel %vm384, %v248, 0.0
    %v426 = vadd.f32 %v424, %v425
    %427 = vadd.xlane.f32.xlu0 %v426
    %v428 = vpop.xlane.xlu0 %427
    %v429 = vsel %vm382, %v250, 0.0
    %v430 = vsel %vm384, %v251, 0.0
    %v431 = vadd.f32 %v429, %v430
    %432 = vadd.xlane.f32.xlu0 %v431
    %v433 = vpop.xlane.xlu0 %432
    %v434 = vsel %vm382, %v253, 0.0
    %v435 = vsel %vm384, %v254, 0.0
    %v436 = vadd.f32 %v434, %v435
    %437 = vadd.xlane.f32.xlu0 %v436
    %v438 = vpop.xlane.xlu0 %437
    %v439 = vsel %vm382, %v256, 0.0
    %v440 = vsel %vm384, %v257, 0.0
    %v441 = vadd.f32 %v439, %v440
    %442 = vadd.xlane.f32.xlu0 %v441
    %v443 = vpop.xlane.xlu0 %442
    %v444 = vsel %vm382, %v259, 0.0
    %v445 = vsel %vm384, %v260, 0.0
    %v446 = vadd.f32 %v444, %v445
    %447 = vadd.xlane.f32.xlu0 %v446
    %v448 = vpop.xlane.xlu0 %447
    %v449 = vsel %vm382, %v262, 0.0
    %v450 = vsel %vm384, %v263, 0.0
    %v451 = vadd.f32 %v449, %v450
    %452 = vadd.xlane.f32.xlu0 %v451
    %v453 = vpop.xlane.xlu0 %452
    %v454 = vsel %vm382, %v265, 0.0
    %v455 = vsel %vm384, %v266, 0.0
    %v456 = vadd.f32 %v454, %v455
    %457 = vadd.xlane.f32.xlu0 %v456
    %v458 = vpop.xlane.xlu0 %457
    %v459 = vsel %vm382, %v268, 0.0
    %v460 = vsel %vm384, %v269, 0.0
    %v461 = vadd.f32 %v459, %v460
    %462 = vadd.xlane.f32.xlu0 %v461
    %v463 = vpop.xlane.xlu0 %462
    %v464 = vsel %vm382, %v271, 0.0
    %v465 = vsel %vm384, %v272, 0.0
    %v466 = vadd.f32 %v464, %v465
    %467 = vadd.xlane.f32.xlu0 %v466
    %v468 = vpop.xlane.xlu0 %467
    %v469 = vsel %vm382, %v274, 0.0
    %v470 = vsel %vm384, %v275, 0.0
    %v471 = vadd.f32 %v469, %v470
    %472 = vadd.xlane.f32.xlu0 %v471
    %v473 = vpop.xlane.xlu0 %472
    %v474 = vsel %vm382, %v277, 0.0
    %v475 = vsel %vm384, %v278, 0.0
    %v476 = vadd.f32 %v474, %v475
    %477 = vadd.xlane.f32.xlu0 %v476
    %v478 = vpop.xlane.xlu0 %477
    %v479 = vsel %vm382, %v280, 0.0
    %v480 = vsel %vm384, %v281, 0.0
    %v481 = vadd.f32 %v479, %v480
    %482 = vadd.xlane.f32.xlu0 %v481
    %v483 = vpop.xlane.xlu0 %482
    %v484 = vsel %vm382, %v283, 0.0
    %v485 = vsel %vm384, %v284, 0.0
    %v486 = vadd.f32 %v484, %v485
    %487 = vadd.xlane.f32.xlu0 %v486
    %v488 = vpop.xlane.xlu0 %487
    %v489 = vsel %vm382, %v286, 0.0
    %v490 = vsel %vm384, %v287, 0.0
    %v491 = vadd.f32 %v489, %v490
    %492 = vadd.xlane.f32.xlu0 %v491
    %v493 = vpop.xlane.xlu0 %492
    %v494 = vsel %vm382, %v289, 0.0
    %v495 = vsel %vm384, %v290, 0.0
    %v496 = vadd.f32 %v494, %v495
    %497 = vadd.xlane.f32.xlu0 %v496
    %v498 = vpop.xlane.xlu0 %497
    %v499 = vsel %vm382, %v292, 0.0
    %v500 = vsel %vm384, %v293, 0.0
    %v501 = vadd.f32 %v499, %v500
    %502 = vadd.xlane.f32.xlu0 %v501
    %v503 = vpop.xlane.xlu0 %502
    %v504 = vsel %vm382, %v295, 0.0
    %v505 = vsel %vm384, %v296, 0.0
    %v506 = vadd.f32 %v504, %v505
    %507 = vadd.xlane.f32.xlu0 %v506
    %v508 = vpop.xlane.xlu0 %507
    %v509 = vsel %vm382, %v298, 0.0
    %v510 = vsel %vm384, %v299, 0.0
    %v511 = vadd.f32 %v509, %v510
    %512 = vadd.xlane.f32.xlu0 %v511
    %v513 = vpop.xlane.xlu0 %512
    %v514 = vsel %vm382, %v301, 0.0
    %v515 = vsel %vm384, %v302, 0.0
    %v516 = vadd.f32 %v514, %v515
    %517 = vadd.xlane.f32.xlu0 %v516
    %v518 = vpop.xlane.xlu0 %517
    %v519 = vsel %vm382, %v304, 0.0
    %v520 = vsel %vm384, %v305, 0.0
    %v521 = vadd.f32 %v519, %v520
    %522 = vadd.xlane.f32.xlu0 %v521
    %v523 = vpop.xlane.xlu0 %522
    %v524 = vsel %vm382, %v307, 0.0
    %v525 = vsel %vm384, %v308, 0.0
    %v526 = vadd.f32 %v524, %v525
    %527 = vadd.xlane.f32.xlu0 %v526
    %v528 = vpop.xlane.xlu0 %527
    %v529 = vsel %vm382, %v310, 0.0
    %v530 = vsel %vm384, %v311, 0.0
    %v531 = vadd.f32 %v529, %v530
    %532 = vadd.xlane.f32.xlu0 %v531
    %v533 = vpop.xlane.xlu0 %532
    %v534 = vsel %vm382, %v313, 0.0
    %v535 = vsel %vm384, %v314, 0.0
    %v536 = vadd.f32 %v534, %v535
    %537 = vadd.xlane.f32.xlu0 %v536
    %v538 = vpop.xlane.xlu0 %537
    %v539 = vsel %vm382, %v316, 0.0
    %v540 = vsel %vm384, %v317, 0.0
    %v541 = vadd.f32 %v539, %v540
    %542 = vadd.xlane.f32.xlu0 %v541
    %v543 = vpop.xlane.xlu0 %542
    %v544 = vmul.f32 %v388, %v82
    %v545 = vmul.f32 %v393, %v82
    %v546 = vmul.f32 %v398, %v82
    %v547 = vmul.f32 %v403, %v82
    %v548 = vmul.f32 %v408, %v82
    %v549 = vmul.f32 %v413, %v82
    %v550 = vmul.f32 %v418, %v82
    %v551 = vmul.f32 %v423, %v82
    %v552 = vmul.f32 %v428, %v82
    %v553 = vmul.f32 %v433, %v82
    %v554 = vmul.f32 %v438, %v82
    %v555 = vmul.f32 %v443, %v82
    %v556 = vmul.f32 %v448, %v82
    %v557 = vmul.f32 %v453, %v82
    %v558 = vmul.f32 %v458, %v82
    %v559 = vmul.f32 %v463, %v82
    %v560 = vmul.f32 %v468, %v82
    %v561 = vmul.f32 %v473, %v82
    %v562 = vmul.f32 %v478, %v82
    %v563 = vmul.f32 %v483, %v82
    %v564 = vmul.f32 %v488, %v82
    %v565 = vmul.f32 %v493, %v82
    %v566 = vmul.f32 %v498, %v82
    %v567 = vmul.f32 %v503, %v82
    %v568 = vmul.f32 %v508, %v82
    %v569 = vmul.f32 %v513, %v82
    %v570 = vmul.f32 %v518, %v82
    %v571 = vmul.f32 %v523, %v82
    %v572 = vmul.f32 %v528, %v82
    %v573 = vmul.f32 %v533, %v82
    %v574 = vmul.f32 %v538, %v82
    %v575 = vmul.f32 %v543, %v82
    %v608 = vperm.slane %v544, %v108
    %v609 = vperm.slane %v545, %v108
    %v610 = vperm.slane %v546, %v108
    %v611 = vperm.slane %v547, %v108
    %v612 = vperm.slane %v548, %v108
    %v613 = vperm.slane %v549, %v108
    %v614 = vperm.slane %v550, %v108
    %v615 = vperm.slane %v551, %v108
    %v616 = vperm.slane %v552, %v108
    %v617 = vperm.slane %v553, %v108
    %v618 = vperm.slane %v554, %v108
    %v619 = vperm.slane %v555, %v108
    %v620 = vperm.slane %v556, %v108
    %v621 = vperm.slane %v557, %v108
    %v622 = vperm.slane %v558, %v108
    %v623 = vperm.slane %v559, %v108
    %v624 = vperm.slane %v560, %v108
    %v625 = vperm.slane %v561, %v108
    %v626 = vperm.slane %v562, %v108
    %v627 = vperm.slane %v563, %v108
    %v628 = vperm.slane %v564, %v108
    %v629 = vperm.slane %v565, %v108
    %v630 = vperm.slane %v566, %v108
    %v631 = vperm.slane %v567, %v108
    %v632 = vperm.slane %v568, %v108
    %v633 = vperm.slane %v569, %v108
    %v634 = vperm.slane %v570, %v108
    %v635 = vperm.slane %v571, %v108
    %v636 = vperm.slane %v572, %v108
    %v637 = vperm.slane %v573, %v108
    %v638 = vperm.slane %v574, %v108
    %v639 = vperm.slane %v575, %v108
    %v640 = vsel %vm129, %v609, %v608
    %vm641 = vcmask 1042434
    %v642 = vsel %vm641, %v610, %v640
    %vm643 = vcmask 1043459
    %v644 = vsel %vm643, %v611, %v642
    %vm645 = vcmask 1044484
    %v646 = vsel %vm645, %v612, %v644
    %vm647 = vcmask 1045509
    %v648 = vsel %vm647, %v613, %v646
    %vm649 = vcmask 1046534
    %v650 = vsel %vm649, %v614, %v648
    %vm651 = vcmask 1047559
    %v652 = vsel %vm651, %v615, %v650
    %v653 = vsel %vm129, %v617, %v616
    %v654 = vsel %vm641, %v618, %v653
    %v655 = vsel %vm643, %v619, %v654
    %v656 = vsel %vm645, %v620, %v655
    %v657 = vsel %vm647, %v621, %v656
    %v658 = vsel %vm649, %v622, %v657
    %v659 = vsel %vm651, %v623, %v658
    %v660 = vsel %vm129, %v625, %v624
    %v661 = vsel %vm641, %v626, %v660
    %v662 = vsel %vm643, %v627, %v661
    %v663 = vsel %vm645, %v628, %v662
    %v664 = vsel %vm647, %v629, %v663
    %v665 = vsel %vm649, %v630, %v664
    %v666 = vsel %vm651, %v631, %v665
    %v667 = vsel %vm129, %v633, %v632
    %v668 = vsel %vm641, %v634, %v667
    %v669 = vsel %vm643, %v635, %v668
    %v670 = vsel %vm645, %v636, %v669
    %v671 = vsel %vm647, %v637, %v670
    %v672 = vsel %vm649, %v638, %v671
    %v673 = vsel %vm651, %v639, %v672
    %678 = vxpose.xlu0.b32.start [1/16] %v652, 128
    %679 = vxpose.xlu0.b32.cont [2/16] %v659, 128
    %680 = vxpose.xlu0.b32.cont [3/16] 0.0, 128
    %681 = vxpose.xlu0.b32.cont [4/16] 0.0, 128
    %682 = vxpose.xlu0.b32.cont [5/16] 0.0, 128
    %683 = vxpose.xlu0.b32.cont [6/16] 0.0, 128
    %684 = vxpose.xlu0.b32.cont [7/16] 0.0, 128
    %685 = vxpose.xlu0.b32.cont [8/16] 0.0, 128
    %686 = vxpose.xlu0.b32.cont [9/16] 0.0, 128
    %687 = vxpose.xlu0.b32.cont [10/16] 0.0, 128
    %688 = vxpose.xlu0.b32.cont [11/16] 0.0, 128
    %689 = vxpose.xlu0.b32.cont [12/16] 0.0, 128
    %690 = vxpose.xlu0.b32.cont [13/16] 0.0, 128
    %691 = vxpose.xlu0.b32.cont [14/16] 0.0, 128
    %692 = vxpose.xlu0.b32.cont [15/16] 0.0, 128
    %693 = vxpose.xlu0.b32.end [16/16] 0.0, 128
    %v694 = vpop.trf.xlu0
    %v695 = vpop.trf.xlu0
    %v696 = vpop.trf.xlu0
    %v697 = vpop.trf.xlu0
    %v698 = vpop.trf.xlu0
    %v699 = vpop.trf.xlu0
    %v700 = vpop.trf.xlu0
    %v701 = vpop.trf.xlu0
    %v702 = vpop.trf.xlu0
    %v703 = vpop.trf.xlu0
    %v704 = vpop.trf.xlu0
    %v705 = vpop.trf.xlu0
    %v706 = vpop.trf.xlu0
    %v707 = vpop.trf.xlu0
    %v708 = vpop.trf.xlu0
    %v709 = vpop.trf.xlu0
    %710 = vxpose.xlu0.b32.start [1/16] %v666, 128
    %711 = vxpose.xlu0.b32.cont [2/16] %v673, 128
    %712 = vxpose.xlu0.b32.cont [3/16] 0.0, 128
    %713 = vxpose.xlu0.b32.cont [4/16] 0.0, 128
    %714 = vxpose.xlu0.b32.cont [5/16] 0.0, 128
    %715 = vxpose.xlu0.b32.cont [6/16] 0.0, 128
    %716 = vxpose.xlu0.b32.cont [7/16] 0.0, 128
    %717 = vxpose.xlu0.b32.cont [8/16] 0.0, 128
    %718 = vxpose.xlu0.b32.cont [9/16] 0.0, 128
    %719 = vxpose.xlu0.b32.cont [10/16] 0.0, 128
    %720 = vxpose.xlu0.b32.cont [11/16] 0.0, 128
    %721 = vxpose.xlu0.b32.cont [12/16] 0.0, 128
    %722 = vxpose.xlu0.b32.cont [13/16] 0.0, 128
    %723 = vxpose.xlu0.b32.cont [14/16] 0.0, 128
    %724 = vxpose.xlu0.b32.cont [15/16] 0.0, 128
    %725 = vxpose.xlu0.b32.end [16/16] 0.0, 128
    %v726 = vpop.trf.xlu0
    %v727 = vpop.trf.xlu0
    %v728 = vpop.trf.xlu0
    %v729 = vpop.trf.xlu0
    %v730 = vpop.trf.xlu0
    %v731 = vpop.trf.xlu0
    %v732 = vpop.trf.xlu0
    %v733 = vpop.trf.xlu0
    %v734 = vpop.trf.xlu0
    %v735 = vpop.trf.xlu0
    %v736 = vpop.trf.xlu0
    %v737 = vpop.trf.xlu0
    %v738 = vpop.trf.xlu0
    %v739 = vpop.trf.xlu0
    %v740 = vpop.trf.xlu0
    %v741 = vpop.trf.xlu0
    %v742 = vld [vmem:[%s4] sm:$0xff]
    %v743 = vld [vmem:[%s4 + $0x8] sm:$0xff]
    %v744 = vld [vmem:[%s5] sm:$0x1]
    %v746 = vperm.slane %v744, 0
    %750 = vst [vmem:[#allocation1] ss:$2 sm:$0xff] %v694
    %s751 = scalar_lea.vmem [#allocation1], 1
    %752 = vst [vmem:[%s751] ss:$2 sm:$0xff] %v726
    %v753 = vld.sshfl [vmem:[#allocation1] sm:$0xff pattern:$0x75316420]
    %vm754 = vcmask 130048
    %v755 = vsel %vm754, %v753, 0
    %757 = vmatpush.msra.mxu0 0.0
    %758 = vmatpush.msra.mxu0 0.0
    %759 = vmatpush.msra.mxu0 0.0
    %760 = vmatpush.msra.mxu0 0.0
    %761 = vmatpush.msra.mxu0 0.0
    %762 = vmatpush.msra.mxu0 0.0
    %763 = vmatpush.msra.mxu0 0.0
    %764 = vmatpush.msra.mxu0 0.0
    %765 = vmatpush.msra.mxu0 0.0
    %766 = vmatpush.msra.mxu0 0.0
    %767 = vmatpush.msra.mxu0 0.0
    %768 = vmatpush.msra.mxu0 0.0
    %769 = vmatpush.msra.mxu0 0.0
    %770 = vmatpush.msra.mxu0 0.0
    %771 = vmatpush.msra.mxu0 %v743
    %772 = vmatpush.msra.mxu0 %v742
    %773 = vmatmul.f32.gmra.mxu0 %v755
    %v774 = vpop.f32.mrf.mxu0
    %v775 = vadd.f32 %v746, %v774
    %776 = vdwg.mxu0
    %v777 = vtanh.pop %v775
    %778 = vst [vmem:[#allocation4] sm:$0xff] %v777
    // Predicated region
    $region26: #{glimpse_clouds_forward.1} parent=1 // pred_check
      _
    $region27: #{glimpse_clouds_forward.1} parent=1 // pred_check_branch
      %780 = sbr.rel (0) target = $region29
    $region28: #{glimpse_clouds_forward.1} parent=1 // pred_region
      %782 = vsyncadd [#allocation3], 0
      %s784 = sshll.u32 [#allocation2], 4
      %s785 = int_to_ptr.vmem [resolvable:$true] %s784
      %s786 = sshll.u32 %s6, 4
      %s787 = int_to_ptr.hbm [resolvable:$true] %s786
      %789 = dma.vmem_to_hbm [thread:$0]  %s785, 32, %s787, [#allocation3]
    $region29: #{glimpse_clouds_forward.1} parent=1 // pred_fallthru
      _
    // Predicated region
    $region30: #{glimpse_clouds_forward.1} parent=1 // pred_check
      _
    $region31: #{glimpse_clouds_forward.1} parent=1 // pred_check_branch
      %791 = sbr.rel (0) target = $region33
    $region32: #{glimpse_clouds_forward.1} parent=1 // pred_region
      %793 = vsyncadd [#allocation5], 0
      %s795 = sshll.u32 [#allocation4], 4
      %s796 = int_to_ptr.vmem [resolvable:$true] %s795
      %s797 = sshll.u32 %s7, 4
      %s798 = int_to_ptr.hbm [resolvable:$true] %s797
      %800 = dma.vmem_to_hbm [thread:$0]  %s796, 128, %s798, [#allocation5]
    $region33: #{glimpse_clouds_forward.1} parent=1 // pred_fallthru
      _
    // Predicated region
    $region34: #{glimpse_clouds_forward.1} parent=1 // pred_check
      _
    $region35: #{glimpse_clouds_forward.1} parent=1 // pred_check_branch
      %802 = sbr.rel (0) target = $region37
    $region36: #{glimpse_clouds_forward.1} parent=1 // pred_region
      %804 = dma.done [#allocation3], 32
    $region37: #{glimpse_clouds_forward.1} parent=1 // pred_fallthru
      _
    // Predicated region
    $region38: #{glimpse_clouds_forward.1} parent=1 // pred_check
      _
    $region39: #{glimpse_clouds_forward.1} parent=1 // pred_check_branch
      %806 = sbr.rel (0) target = $region41
    $region40: #{glimpse_clouds_forward.1} parent=1 // pred_region
      %808 = dma.done [#allocation5], 128
    $region41: #{glimpse_clouds_forward.1} parent=1 // pred_fallthru
      _
    %809 = vsyncpa [#allocation3], 1
    %810 = vsyncpa [#allocation5], 1

</llo_original>
